<compile_context>
chip_gen: v6e
topology: v6e:2x2x1
jax: 0.10.0
libtpu: 0.0.40
codegen_flags: <defaults>
</compile_context>

<pallas_src>
import jax
import jax.numpy as jnp
from jax.experimental import pallas as pl
from jax.experimental.pallas import tpu as pltpu


def _fu_kernel(x_ref, w1_ref, b1_ref, w2_ref, b2_ref, o_ref):
    # x_ref / o_ref: (nb, C, t_hw).  w*_ref: (C, C) = (C_out, C_in).  b*_ref: (C, 1).
    _, C, _ = x_ref.shape

    x = x_ref[...]
    xf = x.astype(jnp.float32) if x.dtype != jnp.float32 else x

    w1 = w1_ref[...].astype(jnp.float32)
    b1 = b1_ref[...].astype(jnp.float32)
    w2 = w2_ref[...].astype(jnp.float32)
    b2 = b2_ref[...].astype(jnp.float32)

    def channel_mix(xin, w, b):
        # y[:, co, :] = sum_ci w[co, ci] * xin[:, ci, :] + b[co]
        # Each term is a full-tile (nb, C, t_hw) FMA:
        #   (1, C, 1) weight column (lane-broadcast) * (nb, 1, t_hw) pixel row
        #   (sublane-broadcast).  Bias is folded into the first accumulate.
        acc = b[None, :, :] + w[None, :, 0:1] * xin[:, 0:1, :]
        for ci in range(1, C):
            acc = acc + w[None, :, ci:ci + 1] * xin[:, ci:ci + 1, :]
        return acc

    h = jnp.maximum(channel_mix(xf, w1, b1), 0.0)   # conv1 + bias + ReLU
    y = channel_mix(h, w2, b2) + xf                 # conv2 + bias + residual

    o_ref[...] = y.astype(o_ref.dtype)


def _choose_tiling(N, C, HW_p, itemsize, budget_bytes=1 << 20):
    """Pick (nb, t_hw, n_hw): lane-dense pixel tile + batch fold, ~<=1 MiB/block."""
    # Largest multiple-of-128 divisor of HW_p within the byte budget.
    max_lanes = max(128, budget_bytes // (C * itemsize))
    t_hw = 128
    for m in range(1, HW_p // 128 + 1):
        if HW_p % m == 0:
            cand = HW_p // m
            if cand % 128 == 0 and cand <= max_lanes:
                t_hw = cand
                break
    n_hw = HW_p // t_hw

    # v7x megacore: guarantee >=2 independent grid steps when possible.
    if N * n_hw < 2 and n_hw == 1 and HW_p % 256 == 0:
        t_hw = HW_p // 2
        n_hw = 2

    # Fold batch elements into the block when the pixel extent leaves tiny
    # blocks, but never collapse the grid below 2 steps (when >=2 exist).
    nb = 1
    for cand in range(N, 0, -1):
        if N % cand:
            continue
        if cand * C * t_hw * itemsize > budget_bytes:
            continue
        if (N // cand) * n_hw < min(2, N * n_hw):
            continue
        nb = cand
        break
    return nb, t_hw, n_hw


def fu_forward(x_nchw, w1, b1, w2, b2):
    """x_nchw: (N, C, H, W).  w1, w2: (C_out, C_in).  b1, b2: (C,)."""
    N, C, H, W = x_nchw.shape
    assert w1.shape == (C, C) and w2.shape == (C, C)
    assert b1.shape == (C,) and b2.shape == (C,)

    HW = H * W
    x3 = x_nchw.reshape(N, C, HW)        # free reshape, no transpose

    # Pad the pixel axis to a multiple of 128 so all stores are lane-dense.
    HW_p = ((HW + 127) // 128) * 128
    if HW_p != HW:
        x3 = jnp.pad(x3, ((0, 0), (0, 0), (0, HW_p - HW)))

    itemsize = jnp.dtype(x3.dtype).itemsize
    nb, t_hw, n_hw = _choose_tiling(N, C, HW_p, itemsize)
    assert N % nb == 0 and HW_p % t_hw == 0

    b1c = b1.reshape(C, 1)
    b2c = b2.reshape(C, 1)

    const_map = lambda n, j: (0, 0)

    out3 = pl.pallas_call(
        _fu_kernel,
        out_shape=jax.ShapeDtypeStruct((N, C, HW_p), x3.dtype),
        grid_spec=pltpu.PrefetchScalarGridSpec(
            num_scalar_prefetch=0,
            grid=(N // nb, n_hw),
            in_specs=[
                # streamed pixel tile: (nb batch rows) x (C channels) x (lane-dense pixels)
                pl.BlockSpec((nb, C, t_hw), lambda n, j: (n, 0, j)),
                # invariant params: tiny VMEM blocks, constant index_map
                pl.BlockSpec((C, C), const_map),   # w1
                pl.BlockSpec((C, 1), const_map),   # b1
                pl.BlockSpec((C, C), const_map),   # w2
                pl.BlockSpec((C, 1), const_map),   # b2
            ],
            out_specs=pl.BlockSpec((nb, C, t_hw), lambda n, j: (n, 0, j)),
        ),
        compiler_params=pltpu.CompilerParams(
            dimension_semantics=("parallel", "parallel")),
    )(x3, w1, b1c, w2, b2c)

    if HW_p != HW:
        out3 = out3[:, :, :HW]
    return out3.reshape(N, C, H, W)


def _reference(x_nchw, w1, b1, w2, b2):
    # Pure-JAX reference: 1x1 conv == channel matmul with weights (C_out, C_in).
    h = jnp.einsum("oc,nchw->nohw", w1, x_nchw) + b1[None, :, None, None]
    h = jnp.maximum(h, 0.0)
    y = jnp.einsum("oc,nchw->nohw", w2, h) + b2[None, :, None, None]
    return y + x_nchw


if __name__ == "__main__":
    key = jax.random.PRNGKey(0)
    k_x, k_w1, k_b1, k_w2, k_b2 = jax.random.split(key, 5)

    N, C, H, W = 2, 4, 16, 16            # dim = 4
    x = jax.random.normal(k_x, (N, C, H, W), dtype=jnp.float32)

    # PyTorch conv weight (C_out, C_in, 1, 1) stored here as (C_out, C_in).
    scale = 1.0 / (C ** 0.5)
    w1 = jax.random.uniform(k_w1, (C, C), jnp.float32, -scale, scale)
    b1 = jax.random.uniform(k_b1, (C,), jnp.float32, -scale, scale)
    w2 = jax.random.uniform(k_w2, (C, C), jnp.float32, -scale, scale)
    b2 = jax.random.uniform(k_b2, (C,), jnp.float32, -scale, scale)

    out = jax.block_until_ready(fu_forward(x, w1, b1, w2, b2))

    ref = _reference(x, w1, b1, w2, b2)
    assert out.shape == (N, C, H, W)
    assert jnp.allclose(out, ref, atol=1e-5, rtol=1e-5), "mismatch vs reference"

    print("KERNEL_OK")
</pallas_src>

<mosaic_0001>
module attributes {stable_mosaic.version = 11 : i64} {
  func.func @_fu_kernel(%arg0: i32, %arg1: i32, %arg2: memref<1x4x256xf32, #tpu.memory_space<vmem>>, %arg3: memref<4x4xf32, #tpu.memory_space<vmem>>, %arg4: memref<4x1xf32, #tpu.memory_space<vmem>>, %arg5: memref<4x4xf32, #tpu.memory_space<vmem>>, %arg6: memref<4x1xf32, #tpu.memory_space<vmem>>, %arg7: memref<1x4x256xf32, #tpu.memory_space<vmem>>) attributes {dimension_semantics = [#tpu.dimension_semantics<parallel>, #tpu.dimension_semantics<parallel>], iteration_bounds = array<i64: 2, 1>, scalar_prefetch = 0 : i64, scratch_operands = 0 : i64, tpu.core_type = #tpu.core_type<tc>, window_params = [{transform_indices = @transform_0, window_bounds = array<i64: 1, 4, 256>}, {pipeline_mode = #tpu.pipeline_mode<synchronous>, transform_indices = @transform_1, window_bounds = array<i64: 4, 4>}, {pipeline_mode = #tpu.pipeline_mode<synchronous>, transform_indices = @transform_2, window_bounds = array<i64: 4, 1>}, {pipeline_mode = #tpu.pipeline_mode<synchronous>, transform_indices = @transform_3, window_bounds = array<i64: 4, 4>}, {pipeline_mode = #tpu.pipeline_mode<synchronous>, transform_indices = @transform_4, window_bounds = array<i64: 4, 1>}, {transform_indices = @transform_5, window_bounds = array<i64: 1, 4, 256>}]} {
    %c0 = arith.constant 0 : index
    %c0_0 = arith.constant 0 : index
    %c0_1 = arith.constant 0 : index
    %0 = vector.load %arg2[%c0, %c0_0, %c0_1] : memref<1x4x256xf32, #tpu.memory_space<vmem>>, vector<1x4x256xf32>
    %c0_2 = arith.constant 0 : index
    %c0_3 = arith.constant 0 : index
    %1 = vector.load %arg3[%c0_2, %c0_3] : memref<4x4xf32, #tpu.memory_space<vmem>>, vector<4x4xf32>
    %c0_4 = arith.constant 0 : index
    %c0_5 = arith.constant 0 : index
    %2 = vector.load %arg4[%c0_4, %c0_5] : memref<4x1xf32, #tpu.memory_space<vmem>>, vector<4x1xf32>
    %c0_6 = arith.constant 0 : index
    %c0_7 = arith.constant 0 : index
    %3 = vector.load %arg5[%c0_6, %c0_7] : memref<4x4xf32, #tpu.memory_space<vmem>>, vector<4x4xf32>
    %c0_8 = arith.constant 0 : index
    %c0_9 = arith.constant 0 : index
    %4 = vector.load %arg6[%c0_8, %c0_9] : memref<4x1xf32, #tpu.memory_space<vmem>>, vector<4x1xf32>
    %5 = vector.shape_cast %2 : vector<4x1xf32> to vector<1x4x1xf32>
    %6 = vector.extract_strided_slice %1 {offsets = [0, 0], sizes = [4, 1], strides = [1, 1]} : vector<4x4xf32> to vector<4x1xf32>
    %7 = vector.shape_cast %6 : vector<4x1xf32> to vector<1x4x1xf32>
    %8 = vector.extract_strided_slice %0 {offsets = [0, 0, 0], sizes = [1, 1, 256], strides = [1, 1, 1]} : vector<1x4x256xf32> to vector<1x1x256xf32>
    %9 = vector.broadcast %7 : vector<1x4x1xf32> to vector<1x4x256xf32>
    %10 = vector.broadcast %8 : vector<1x1x256xf32> to vector<1x4x256xf32>
    %11 = arith.mulf %9, %10 : vector<1x4x256xf32>
    %12 = vector.broadcast %5 : vector<1x4x1xf32> to vector<1x4x256xf32>
    %13 = arith.addf %12, %11 : vector<1x4x256xf32>
    %14 = vector.extract_strided_slice %1 {offsets = [0, 1], sizes = [4, 1], strides = [1, 1]} : vector<4x4xf32> to vector<4x1xf32>
    %15 = vector.shape_cast %14 : vector<4x1xf32> to vector<1x4x1xf32>
    %16 = vector.extract_strided_slice %0 {offsets = [0, 1, 0], sizes = [1, 1, 256], strides = [1, 1, 1]} : vector<1x4x256xf32> to vector<1x1x256xf32>
    %17 = vector.broadcast %15 : vector<1x4x1xf32> to vector<1x4x256xf32>
    %18 = vector.broadcast %16 : vector<1x1x256xf32> to vector<1x4x256xf32>
    %19 = arith.mulf %17, %18 : vector<1x4x256xf32>
    %20 = arith.addf %13, %19 : vector<1x4x256xf32>
    %21 = vector.extract_strided_slice %1 {offsets = [0, 2], sizes = [4, 1], strides = [1, 1]} : vector<4x4xf32> to vector<4x1xf32>
    %22 = vector.shape_cast %21 : vector<4x1xf32> to vector<1x4x1xf32>
    %23 = vector.extract_strided_slice %0 {offsets = [0, 2, 0], sizes = [1, 1, 256], strides = [1, 1, 1]} : vector<1x4x256xf32> to vector<1x1x256xf32>
    %24 = vector.broadcast %22 : vector<1x4x1xf32> to vector<1x4x256xf32>
    %25 = vector.broadcast %23 : vector<1x1x256xf32> to vector<1x4x256xf32>
    %26 = arith.mulf %24, %25 : vector<1x4x256xf32>
    %27 = arith.addf %20, %26 : vector<1x4x256xf32>
    %28 = vector.extract_strided_slice %1 {offsets = [0, 3], sizes = [4, 1], strides = [1, 1]} : vector<4x4xf32> to vector<4x1xf32>
    %29 = vector.shape_cast %28 : vector<4x1xf32> to vector<1x4x1xf32>
    %30 = vector.extract_strided_slice %0 {offsets = [0, 3, 0], sizes = [1, 1, 256], strides = [1, 1, 1]} : vector<1x4x256xf32> to vector<1x1x256xf32>
    %31 = vector.broadcast %29 : vector<1x4x1xf32> to vector<1x4x256xf32>
    %32 = vector.broadcast %30 : vector<1x1x256xf32> to vector<1x4x256xf32>
    %33 = arith.mulf %31, %32 : vector<1x4x256xf32>
    %34 = arith.addf %27, %33 : vector<1x4x256xf32>
    %cst = arith.constant 0.000000e+00 : f32
    %35 = vector.broadcast %cst : f32 to vector<1x4x256xf32>
    %36 = arith.maximumf %34, %35 : vector<1x4x256xf32>
    %37 = vector.shape_cast %4 : vector<4x1xf32> to vector<1x4x1xf32>
    %38 = vector.extract_strided_slice %3 {offsets = [0, 0], sizes = [4, 1], strides = [1, 1]} : vector<4x4xf32> to vector<4x1xf32>
    %39 = vector.shape_cast %38 : vector<4x1xf32> to vector<1x4x1xf32>
    %40 = vector.extract_strided_slice %36 {offsets = [0, 0, 0], sizes = [1, 1, 256], strides = [1, 1, 1]} : vector<1x4x256xf32> to vector<1x1x256xf32>
    %41 = vector.broadcast %39 : vector<1x4x1xf32> to vector<1x4x256xf32>
    %42 = vector.broadcast %40 : vector<1x1x256xf32> to vector<1x4x256xf32>
    %43 = arith.mulf %41, %42 : vector<1x4x256xf32>
    %44 = vector.broadcast %37 : vector<1x4x1xf32> to vector<1x4x256xf32>
    %45 = arith.addf %44, %43 : vector<1x4x256xf32>
    %46 = vector.extract_strided_slice %3 {offsets = [0, 1], sizes = [4, 1], strides = [1, 1]} : vector<4x4xf32> to vector<4x1xf32>
    %47 = vector.shape_cast %46 : vector<4x1xf32> to vector<1x4x1xf32>
    %48 = vector.extract_strided_slice %36 {offsets = [0, 1, 0], sizes = [1, 1, 256], strides = [1, 1, 1]} : vector<1x4x256xf32> to vector<1x1x256xf32>
    %49 = vector.broadcast %47 : vector<1x4x1xf32> to vector<1x4x256xf32>
    %50 = vector.broadcast %48 : vector<1x1x256xf32> to vector<1x4x256xf32>
    %51 = arith.mulf %49, %50 : vector<1x4x256xf32>
    %52 = arith.addf %45, %51 : vector<1x4x256xf32>
    %53 = vector.extract_strided_slice %3 {offsets = [0, 2], sizes = [4, 1], strides = [1, 1]} : vector<4x4xf32> to vector<4x1xf32>
    %54 = vector.shape_cast %53 : vector<4x1xf32> to vector<1x4x1xf32>
    %55 = vector.extract_strided_slice %36 {offsets = [0, 2, 0], sizes = [1, 1, 256], strides = [1, 1, 1]} : vector<1x4x256xf32> to vector<1x1x256xf32>
    %56 = vector.broadcast %54 : vector<1x4x1xf32> to vector<1x4x256xf32>
    %57 = vector.broadcast %55 : vector<1x1x256xf32> to vector<1x4x256xf32>
    %58 = arith.mulf %56, %57 : vector<1x4x256xf32>
    %59 = arith.addf %52, %58 : vector<1x4x256xf32>
    %60 = vector.extract_strided_slice %3 {offsets = [0, 3], sizes = [4, 1], strides = [1, 1]} : vector<4x4xf32> to vector<4x1xf32>
    %61 = vector.shape_cast %60 : vector<4x1xf32> to vector<1x4x1xf32>
    %62 = vector.extract_strided_slice %36 {offsets = [0, 3, 0], sizes = [1, 1, 256], strides = [1, 1, 1]} : vector<1x4x256xf32> to vector<1x1x256xf32>
    %63 = vector.broadcast %61 : vector<1x4x1xf32> to vector<1x4x256xf32>
    %64 = vector.broadcast %62 : vector<1x1x256xf32> to vector<1x4x256xf32>
    %65 = arith.mulf %63, %64 : vector<1x4x256xf32>
    %66 = arith.addf %59, %65 : vector<1x4x256xf32>
    %67 = arith.addf %66, %0 : vector<1x4x256xf32>
    %c0_10 = arith.constant 0 : index
    %c0_11 = arith.constant 0 : index
    %c0_12 = arith.constant 0 : index
    %68 = vector.load %arg7[%c0_10, %c0_11, %c0_12] : memref<1x4x256xf32, #tpu.memory_space<vmem>>, vector<1x4x256xf32>
    tpu.vector_store %arg7[%c0_10, %c0_11, %c0_12], %67 {strides = array<i32>} : memref<1x4x256xf32, #tpu.memory_space<vmem>>, vector<1x4x256xf32>,
    return
  }
  func.func @transform_0(%arg0: i32, %arg1: i32) -> (i32, i32, i32) {
    %c0_i32 = arith.constant 0 : i32
    %c0_i32_0 = arith.constant 0 : i32
    return %arg0, %c0_i32, %arg1 : i32, i32, i32
  }
  func.func @transform_1(%arg0: i32, %arg1: i32) -> (i32, i32) {
    %c0_i32 = arith.constant 0 : i32
    %c0_i32_0 = arith.constant 0 : i32
    %c0_i32_1 = arith.constant 0 : i32
    return %c0_i32, %c0_i32_0 : i32, i32
  }
  func.func @transform_2(%arg0: i32, %arg1: i32) -> (i32, i32) {
    %c0_i32 = arith.constant 0 : i32
    %c0_i32_0 = arith.constant 0 : i32
    %c0_i32_1 = arith.constant 0 : i32
    return %c0_i32, %c0_i32_0 : i32, i32
  }
  func.func @transform_3(%arg0: i32, %arg1: i32) -> (i32, i32) {
    %c0_i32 = arith.constant 0 : i32
    %c0_i32_0 = arith.constant 0 : i32
    %c0_i32_1 = arith.constant 0 : i32
    return %c0_i32, %c0_i32_0 : i32, i32
  }
  func.func @transform_4(%arg0: i32, %arg1: i32) -> (i32, i32) {
    %c0_i32 = arith.constant 0 : i32
    %c0_i32_0 = arith.constant 0 : i32
    %c0_i32_1 = arith.constant 0 : i32
    return %c0_i32, %c0_i32_0 : i32, i32
  }
  func.func @transform_5(%arg0: i32, %arg1: i32) -> (i32, i32, i32) {
    %c0_i32 = arith.constant 0 : i32
    %c0_i32_0 = arith.constant 0 : i32
    return %arg0, %c0_i32, %arg1 : i32, i32, i32
  }
}

</mosaic_0001>

<llo_original>
// kernel: tpu_custom_call.1
$region0: #{tpu_custom_call.1}
  #allocation0 [shape = 'u32[]', space=smem, size = 0x4, offset = 0x4, fixed_abs, tag = 'smem constant byte address 0x4 - core index']
  #allocation1 [shape = 'u32[144,128]{1,0:T(1,128)}', space=vmem, size = 0x12000, scoped, tag = 'internal scratch']
  %s0 = inlined_call_operand.hbm [shape: f32[2,4,256], index: 0, kind: input, shape index: {}]
  %s1 = inlined_call_operand.vmem [shape: f32[4,4], index: 1, kind: input, shape index: {}]
  %s2 = inlined_call_operand.vmem [shape: f32[4,1], index: 2, kind: input, shape index: {}]
  %s3 = inlined_call_operand.vmem [shape: f32[4,4], index: 3, kind: input, shape index: {}]
  %s4 = inlined_call_operand.vmem [shape: f32[4,1], index: 4, kind: input, shape index: {}]
  %s5 = inlined_call_operand.hbm [shape: f32[2,4,256], index: 5, kind: output, shape index: {}]
  %s6 = sld [smem:[#allocation0]]
  $region57: #{tpu_custom_call.1} parent=0
    _
  %s8 = ssub.s32 1, %s6
  %s9 = scalar_select 0, %s8, %s6
  $region1: #{tpu_custom_call.1} parent=0
    #allocation2 [shape = 'u8[8192]{0}', space=vmem, size = 0x2000, scoped, tag = 'input window, operand 0']
    #allocation3 [shape = 's32[2]{0}', space=sflag, size = 0x8, scoped, tag = 'scoped memory for tpu_custom_call.1']
    #allocation4 [shape = 's32[2]{0}', space=sflag, size = 0x8, scoped, tag = 'scoped memory for tpu_custom_call.1']
    #allocation5 [shape = 'u8[8192]{0}', space=vmem, size = 0x2000, scoped, tag = 'output window, operand 0']
    %10 = vsyncpa [#allocation3], 0
    %s11 = scalar_lea.sflag [#allocation3], 1
    %12 = vsyncpa %s11, 0
    %13 = vsyncpa [#allocation4], 0
    %s14 = scalar_lea.sflag [#allocation4], 1
    %15 = vsyncpa %s14, 0
    loop: start=0, step=1, limit=4
    $region2: #{tpu_custom_call.1} parent=1 // loop_pre_header
      _
    $region3: #{tpu_custom_call.1} parent=1 // loop_header
      %s17 = sphi 0, %s21
      %p18 = scmp.ge.s32.totalorder %s17, 4
      %s24 = sphi 0, %s36
      %s25 = sphi 0, %s32
      %s26 = sphi 0, %s24
      %s27 = sphi 0, %s25
      %s28 = sphi 0, %s26
      %s29 = sphi 0, %s27
      %s41 = sphi 0, %s43
      %s44 = sphi 0, %s41
      %s45 = sphi 0, %s44
      %s61 = sphi 0, %s45
      %s65 = sphi 0, %s65
      %s67 = sphi 0, %s65
      %s68 = sphi 0, %s67
      %s82 = sphi 0, %s68
      %s86 = sphi 0, %s86
      %s88 = sphi 0, %s86
      %s89 = sphi 0, %s88
      %s103 = sphi 0, %s89
      %s107 = sphi 0, %s107
      %s109 = sphi 0, %s107
      %s110 = sphi 0, %s109
      %s124 = sphi 0, %s110
      %s128 = sphi 0, %s128
      %s130 = sphi 0, %s128
      %s131 = sphi 0, %s130
      %s145 = sphi 0, %s131
      %s153 = sphi 0, %s155
      %s156 = sphi 0, %s153
      %s157 = sphi 0, %s156
      %s173 = sphi 0, %s157
    $region4: #{tpu_custom_call.1} parent=1 // loop_header_branch
      %20 = sbr.rel (%p18) target = $region8
    $region5: #{tpu_custom_call.1} parent=1 // loop_body
      %s22 = ssub.s32 %s17, 1
      %s23 = ssub.s32 %s17, 2
      %s30 = sadd.s32 1, %s25
      %p31 = scmp.ge.s32.totalorder %s30, 1
      %s32 = scalar_select %p31, 0, %s30
      %s33 = sadd.s32 1, %s24
      %s34 = scalar_select %p31, %s33, %s24
      %p35 = scmp.ge.s32.totalorder %s34, 2
      %s36 = scalar_select %p35, 0, %s34
      %s37 = ssub.s32 %s24, %s36
      %s38 = ssub.s32 %s25, %s32
      %s39 = sor.u32 %s37, %s38
      %p40 = scmp.eq.s32.totalorder %s39, 0
      %s42 = sadd.s32 %s41, 1
      %s43 = scalar_select %p40, %s41, %s42
      %p46 = pneg %p40
      %p47 = scmp.eq.s32.totalorder %s17, 1
      %p48 = por %p46, %p47
      %p49 = scmp.ne.s32.totalorder %s41, %s44
      %p50 = scmp.eq.s32.totalorder %s17, 0
      %p51 = por %p49, %p50
      %p52 = scmp.ne.s32.totalorder %s41, %s44
      %p53 = scmp.eq.s32.totalorder %s22, 1
      %p54 = por %p52, %p53
      %p55 = scmp.ne.s32.totalorder %s44, %s45
      %p56 = scmp.eq.s32.totalorder %s22, 0
      %p57 = por %p55, %p56
      %p58 = scmp.ne.s32.totalorder %s44, %s45
      %p59 = scmp.eq.s32.totalorder %s23, 1
      %p60 = por %p58, %p59
      %p62 = scmp.ne.s32.totalorder %s45, %s61
      %p63 = scmp.eq.s32.totalorder %s23, 0
      %p64 = por %p62, %p63
      %s66 = sadd.s32 %s65, 1
      %p69 = scmp.eq.s32.totalorder %s17, 1
      %p70 = scmp.ne.s32.totalorder %s65, %s67
      %p71 = scmp.eq.s32.totalorder %s17, 0
      %p72 = por %p70, %p71
      %p73 = scmp.ne.s32.totalorder %s65, %s67
      %p74 = scmp.eq.s32.totalorder %s22, 1
      %p75 = por %p73, %p74
      %p76 = scmp.ne.s32.totalorder %s67, %s68
      %p77 = scmp.eq.s32.totalorder %s22, 0
      %p78 = por %p76, %p77
      %p79 = scmp.ne.s32.totalorder %s67, %s68
      %p80 = scmp.eq.s32.totalorder %s23, 1
      %p81 = por %p79, %p80
      %p83 = scmp.ne.s32.totalorder %s68, %s82
      %p84 = scmp.eq.s32.totalorder %s23, 0
      %p85 = por %p83, %p84
      %s87 = sadd.s32 %s86, 1
      %p90 = scmp.eq.s32.totalorder %s17, 1
      %p91 = scmp.ne.s32.totalorder %s86, %s88
      %p92 = scmp.eq.s32.totalorder %s17, 0
      %p93 = por %p91, %p92
      %p94 = scmp.ne.s32.totalorder %s86, %s88
      %p95 = scmp.eq.s32.totalorder %s22, 1
      %p96 = por %p94, %p95
      %p97 = scmp.ne.s32.totalorder %s88, %s89
      %p98 = scmp.eq.s32.totalorder %s22, 0
      %p99 = por %p97, %p98
      %p100 = scmp.ne.s32.totalorder %s88, %s89
      %p101 = scmp.eq.s32.totalorder %s23, 1
      %p102 = por %p100, %p101
      %p104 = scmp.ne.s32.totalorder %s89, %s103
      %p105 = scmp.eq.s32.totalorder %s23, 0
      %p106 = por %p104, %p105
      %s108 = sadd.s32 %s107, 1
      %p111 = scmp.eq.s32.totalorder %s17, 1
      %p112 = scmp.ne.s32.totalorder %s107, %s109
      %p113 = scmp.eq.s32.totalorder %s17, 0
      %p114 = por %p112, %p113
      %p115 = scmp.ne.s32.totalorder %s107, %s109
      %p116 = scmp.eq.s32.totalorder %s22, 1
      %p117 = por %p115, %p116
      %p118 = scmp.ne.s32.totalorder %s109, %s110
      %p119 = scmp.eq.s32.totalorder %s22, 0
      %p120 = por %p118, %p119
      %p121 = scmp.ne.s32.totalorder %s109, %s110
      %p122 = scmp.eq.s32.totalorder %s23, 1
      %p123 = por %p121, %p122
      %p125 = scmp.ne.s32.totalorder %s110, %s124
      %p126 = scmp.eq.s32.totalorder %s23, 0
      %p127 = por %p125, %p126
      %s129 = sadd.s32 %s128, 1
      %p132 = scmp.eq.s32.totalorder %s17, 1
      %p133 = scmp.ne.s32.totalorder %s128, %s130
      %p134 = scmp.eq.s32.totalorder %s17, 0
      %p135 = por %p133, %p134
      %p136 = scmp.ne.s32.totalorder %s128, %s130
      %p137 = scmp.eq.s32.totalorder %s22, 1
      %p138 = por %p136, %p137
      %p139 = scmp.ne.s32.totalorder %s130, %s131
      %p140 = scmp.eq.s32.totalorder %s22, 0
      %p141 = por %p139, %p140
      %p142 = scmp.ne.s32.totalorder %s130, %s131
      %p143 = scmp.eq.s32.totalorder %s23, 1
      %p144 = por %p142, %p143
      %p146 = scmp.ne.s32.totalorder %s131, %s145
      %p147 = scmp.eq.s32.totalorder %s23, 0
      %p148 = por %p146, %p147
      %s149 = ssub.s32 %s24, %s36
      %s150 = ssub.s32 %s25, %s32
      %s151 = sor.u32 %s149, %s150
      %p152 = scmp.eq.s32.totalorder %s151, 0
      %s154 = sadd.s32 %s153, 1
      %s155 = scalar_select %p152, %s153, %s154
      %p158 = pneg %p152
      %p159 = scmp.eq.s32.totalorder %s17, 1
      %p160 = por %p158, %p159
      %p161 = scmp.ne.s32.totalorder %s153, %s156
      %p162 = scmp.eq.s32.totalorder %s17, 0
      %p163 = por %p161, %p162
      %p164 = scmp.ne.s32.totalorder %s153, %s156
      %p165 = scmp.eq.s32.totalorder %s22, 1
      %p166 = por %p164, %p165
      %p167 = scmp.ne.s32.totalorder %s156, %s157
      %p168 = scmp.eq.s32.totalorder %s22, 0
      %p169 = por %p167, %p168
      %p170 = scmp.ne.s32.totalorder %s156, %s157
      %p171 = scmp.eq.s32.totalorder %s23, 1
      %p172 = por %p170, %p171
      %p174 = scmp.ne.s32.totalorder %s157, %s173
      %p175 = scmp.eq.s32.totalorder %s23, 0
      %p176 = por %p174, %p175
      %p177 = scmp.le.s32.totalorder 1, %s17
      %p178 = scmp.lt.s32.totalorder %s17, 3
      %p179 = pnand %p177, %p178
      %p180 = pneg %p179
      // Predicated region
      $region9: #{tpu_custom_call.1} parent=5 // pred_check
        _
      $region10: #{tpu_custom_call.1} parent=5 // pred_check_branch
        %182 = sbr.rel (%p179) target = $region12
      $region11: #{tpu_custom_call.1} parent=5 // pred_region
        %s183 = ssub.s32 %s17, 1
        // Predicated region
        $region13: #{tpu_custom_call.1} parent=11 // pred_check
          %p184 = pneg %p78
        $region14: #{tpu_custom_call.1} parent=11 // pred_check_branch
          %186 = sbr.rel (%p184) target = $region16
        $region15: #{tpu_custom_call.1} parent=11 // pred_region
          _
        $region16: #{tpu_custom_call.1} parent=11 // pred_fallthru
          _
        // Predicated region
        $region17: #{tpu_custom_call.1} parent=11 // pred_check
          %p187 = pneg %p99
        $region18: #{tpu_custom_call.1} parent=11 // pred_check_branch
          %189 = sbr.rel (%p187) target = $region20
        $region19: #{tpu_custom_call.1} parent=11 // pred_region
          _
        $region20: #{tpu_custom_call.1} parent=11 // pred_fallthru
          _
        // Predicated region
        $region21: #{tpu_custom_call.1} parent=11 // pred_check
          %p190 = pneg %p120
        $region22: #{tpu_custom_call.1} parent=11 // pred_check_branch
          %192 = sbr.rel (%p190) target = $region24
        $region23: #{tpu_custom_call.1} parent=11 // pred_region
          _
        $region24: #{tpu_custom_call.1} parent=11 // pred_fallthru
          _
        // Predicated region
        $region25: #{tpu_custom_call.1} parent=11 // pred_check
          %p193 = pneg %p141
        $region26: #{tpu_custom_call.1} parent=11 // pred_check_branch
          %195 = sbr.rel (%p193) target = $region28
        $region27: #{tpu_custom_call.1} parent=11 // pred_region
          _
        $region28: #{tpu_custom_call.1} parent=11 // pred_fallthru
          _
      $region12: #{tpu_custom_call.1} parent=5 // pred_fallthru
        _
      %p196 = scmp.lt.s32.totalorder %s17, 2
      // Predicated region
      $region29: #{tpu_custom_call.1} parent=5 // pred_check
        %p197 = pneg %p196
      $region30: #{tpu_custom_call.1} parent=5 // pred_check_branch
        %199 = sbr.rel (%p197) target = $region32
      $region31: #{tpu_custom_call.1} parent=5 // pred_region
        // Predicated region
        $region33: #{tpu_custom_call.1} parent=31 // pred_check
          %p200 = pneg %p51
        $region34: #{tpu_custom_call.1} parent=31 // pred_check_branch
          %202 = sbr.rel (%p200) target = $region36
        $region35: #{tpu_custom_call.1} parent=31 // pred_region
          %s203 = sand.u32 %s41, 1
          %s204 = scalar_lea.sflag [#allocation3], %s203
          %s205 = sand.u32 %s41, 1
          %s206 = smul.addr %s205, 8
          %s207 = scalar_lea.vmem [#allocation2], %s206
          %s208 = smul.u32 2, %s25
          %s210 = ssub.s32 128, 128
          %211 = vsyncadd %s204, %s210
          %s212 = smul.addr %s24, 2
          %s213 = sadd.s32 %s208, %s212
          %s214 = smul.addr %s213, 64
          %s215 = scalar_lea.hbm %s0, %s214
          %s217 = sshll.u32 %s207, 4
          %s218 = int_to_ptr.vmem [resolvable:$true] %s217
          %220 = dma.hbm_to_vmem [thread:$0]  %s215, 128, %s218, %s204
        $region36: #{tpu_custom_call.1} parent=31 // pred_fallthru
          _
      $region32: #{tpu_custom_call.1} parent=5 // pred_fallthru
        _
      %p221 = scmp.le.s32.totalorder 1, %s17
      %p222 = scmp.lt.s32.totalorder %s17, 3
      %p223 = pnand %p221, %p222
      %p224 = pneg %p223
      // Predicated region
      $region37: #{tpu_custom_call.1} parent=5 // pred_check
        _
      $region38: #{tpu_custom_call.1} parent=5 // pred_check_branch
        %226 = sbr.rel (%p223) target = $region40
      $region39: #{tpu_custom_call.1} parent=5 // pred_region
        %s227 = ssub.s32 %s17, 1
        %s228 = sand.u32 %s44, 1
        %s229 = scalar_lea.sflag [#allocation3], %s228
        %s230 = sand.u32 %s44, 1
        %s231 = smul.addr %s230, 8
        %s232 = scalar_lea.vmem [#allocation2], %s231
        // Predicated region
        $region41: #{tpu_custom_call.1} parent=39 // pred_check
          %p233 = pneg %p57
        $region42: #{tpu_custom_call.1} parent=39 // pred_check_branch
          %235 = sbr.rel (%p233) target = $region44
        $region43: #{tpu_custom_call.1} parent=39 // pred_region
          %236 = dma.done %s229, 128
        $region44: #{tpu_custom_call.1} parent=39 // pred_fallthru
          _
        %s237 = sand.u32 %s44, 1
        %s238 = scalar_lea.sflag [#allocation3], %s237
        %s239 = sand.u32 %s44, 1
        %s240 = smul.addr %s239, 8
        %s241 = scalar_lea.vmem [#allocation2], %s240
        %p242 = pneg %p57
        %p243 = pneg %p54
        %p244 = pneg %p78
        %p245 = pneg %p75
        %p246 = pneg %p99
        %p247 = pneg %p96
        %p248 = pneg %p120
        %p249 = pneg %p117
        %p250 = pneg %p141
        %p251 = pneg %p138
        %p252 = pneg %p169
        %p253 = pneg %p166
        %s254 = sand.u32 %s156, 1
        %s255 = scalar_lea.sflag [#allocation4], %s254
        %s256 = sand.u32 %s156, 1
        %s257 = smul.addr %s256, 8
        %s258 = scalar_lea.vmem [#allocation5], %s257
        %s259 = smul.u32 2, %s27
        %s260 = smul.u32 2, %s27
        %v261 = vld [vmem:[%s232] sm:$0xff]
        %v262 = vld [vmem:[%s1] sm:$0xf]
        %v263 = vld [vmem:[%s2] sm:$0xf]
        %v264 = vld [vmem:[%s3] sm:$0xf]
        %v265 = vld [vmem:[%s4] sm:$0xf]
        %267 = vset.pattern.permute.xlu0 0
        %268 = vperm.xlu0 %267, %v262
        %v269 = vpop.permute.xlu0 %268
        %v272 = vlaneseq
        %v273 = vshrl.u32 %v272, 7
        %v274 = vsub.s32 0, %v273
        %v275 = vrot.slane %v261, %v274
        %v276 = vlaneseq
        %v277 = vshrl.u32 %v276, 7
        %v278 = vsub.s32 4, %v277
        %v279 = vrot.slane %v261, %v278
        %v282 = vlaneseq
        %v283 = vshrl.u32 %v282, 7
        %v284 = vsub.s32 0, %v283
        %v285 = vrot.slane %v275, %v284
        %v286 = vlaneseq
        %v287 = vshrl.u32 %v286, 7
        %v288 = vsub.s32 0, %v287
        %v289 = vrot.slane %v279, %v288
        %v290 = vmul.f32 %v269, %v285
        %v291 = vmul.f32 %v269, %v289
        %293 = vset.pattern.permute.xlu0 0
        %294 = vperm.xlu0 %293, %v263
        %v295 = vpop.permute.xlu0 %294
        %v297 = vadd.f32 %v295, %v290
        %v298 = vadd.f32 %v295, %v291
        %299 = vset.pattern.permute.xlu0 1
        %300 = vperm.xlu0 %299, %v262
        %v301 = vpop.permute.xlu0 %300
        %v303 = vlaneseq
        %v304 = vshrl.u32 %v303, 7
        %v305 = vsub.s32 1, %v304
        %v306 = vrot.slane %v261, %v305
        %v307 = vlaneseq
        %v308 = vshrl.u32 %v307, 7
        %v309 = vsub.s32 5, %v308
        %v310 = vrot.slane %v261, %v309
        %v313 = vlaneseq
        %v314 = vshrl.u32 %v313, 7
        %v315 = vsub.s32 1, %v314
        %v316 = vrot.slane %v306, %v315
        %v317 = vlaneseq
        %v318 = vshrl.u32 %v317, 7
        %v319 = vsub.s32 1, %v318
        %v320 = vrot.slane %v310, %v319
        %v321 = vmul.f32 %v301, %v316
        %v322 = vmul.f32 %v301, %v320
        %v323 = vadd.f32 %v297, %v321
        %v324 = vadd.f32 %v298, %v322
        %325 = vset.pattern.permute.xlu0 2
        %326 = vperm.xlu0 %325, %v262
        %v327 = vpop.permute.xlu0 %326
        %v329 = vlaneseq
        %v330 = vshrl.u32 %v329, 7
        %v331 = vsub.s32 2, %v330
        %v332 = vrot.slane %v261, %v331
        %v333 = vlaneseq
        %v334 = vshrl.u32 %v333, 7
        %v335 = vsub.s32 6, %v334
        %v336 = vrot.slane %v261, %v335
        %v339 = vlaneseq
        %v340 = vshrl.u32 %v339, 7
        %v341 = vsub.s32 2, %v340
        %v342 = vrot.slane %v332, %v341
        %v343 = vlaneseq
        %v344 = vshrl.u32 %v343, 7
        %v345 = vsub.s32 2, %v344
        %v346 = vrot.slane %v336, %v345
        %v347 = vmul.f32 %v327, %v342
        %v348 = vmul.f32 %v327, %v346
        %v349 = vadd.f32 %v323, %v347
        %v350 = vadd.f32 %v324, %v348
        %351 = vset.pattern.permute.xlu0 3
        %352 = vperm.xlu0 %351, %v262
        %v353 = vpop.permute.xlu0 %352
        %v355 = vlaneseq
        %v356 = vshrl.u32 %v355, 7
        %v357 = vsub.s32 3, %v356
        %v358 = vrot.slane %v261, %v357
        %v359 = vlaneseq
        %v360 = vshrl.u32 %v359, 7
        %v361 = vsub.s32 7, %v360
        %v362 = vrot.slane %v261, %v361
        %v365 = vlaneseq
        %v366 = vshrl.u32 %v365, 7
        %v367 = vsub.s32 3, %v366
        %v368 = vrot.slane %v358, %v367
        %v369 = vlaneseq
        %v370 = vshrl.u32 %v369, 7
        %v371 = vsub.s32 3, %v370
        %v372 = vrot.slane %v362, %v371
        %v373 = vmul.f32 %v353, %v368
        %v374 = vmul.f32 %v353, %v372
        %v375 = vadd.f32 %v349, %v373
        %v376 = vadd.f32 %v350, %v374
        %v377 = vmax.f32 %v375, 0.0
        %v378 = vmax.f32 %v376, 0.0
        %380 = vset.pattern.permute.xlu0 0
        %381 = vperm.xlu0 %380, %v264
        %v382 = vpop.permute.xlu0 %381
        %v384 = vlaneseq
        %v385 = vshrl.u32 %v384, 7
        %v386 = vsub.s32 0, %v385
        %v387 = vrot.slane %v377, %v386
        %v388 = vlaneseq
        %v389 = vshrl.u32 %v388, 7
        %v390 = vsub.s32 0, %v389
        %v391 = vrot.slane %v378, %v390
        %v392 = vmul.f32 %v382, %v387
        %v393 = vmul.f32 %v382, %v391
        %395 = vset.pattern.permute.xlu0 0
        %396 = vperm.xlu0 %395, %v265
        %v397 = vpop.permute.xlu0 %396
        %v399 = vadd.f32 %v397, %v392
        %v400 = vadd.f32 %v397, %v393
        %401 = vset.pattern.permute.xlu0 1
        %402 = vperm.xlu0 %401, %v264
        %v403 = vpop.permute.xlu0 %402
        %v405 = vlaneseq
        %v406 = vshrl.u32 %v405, 7
        %v407 = vsub.s32 1, %v406
        %v408 = vrot.slane %v377, %v407
        %v409 = vlaneseq
        %v410 = vshrl.u32 %v409, 7
        %v411 = vsub.s32 1, %v410
        %v412 = vrot.slane %v378, %v411
        %v413 = vmul.f32 %v403, %v408
        %v414 = vmul.f32 %v403, %v412
        %v415 = vadd.f32 %v399, %v413
        %v416 = vadd.f32 %v400, %v414
        %417 = vset.pattern.permute.xlu0 2
        %418 = vperm.xlu0 %417, %v264
        %v419 = vpop.permute.xlu0 %418
        %v421 = vlaneseq
        %v422 = vshrl.u32 %v421, 7
        %v423 = vsub.s32 2, %v422
        %v424 = vrot.slane %v377, %v423
        %v425 = vlaneseq
        %v426 = vshrl.u32 %v425, 7
        %v427 = vsub.s32 2, %v426
        %v428 = vrot.slane %v378, %v427
        %v429 = vmul.f32 %v419, %v424
        %v430 = vmul.f32 %v419, %v428
        %v431 = vadd.f32 %v415, %v429
        %v432 = vadd.f32 %v416, %v430
        %433 = vset.pattern.permute.xlu0 3
        %434 = vperm.xlu0 %433, %v264
        %v435 = vpop.permute.xlu0 %434
        %v437 = vlaneseq
        %v438 = vshrl.u32 %v437, 7
        %v439 = vsub.s32 3, %v438
        %v440 = vrot.slane %v377, %v439
        %v441 = vlaneseq
        %v442 = vshrl.u32 %v441, 7
        %v443 = vsub.s32 3, %v442
        %v444 = vrot.slane %v378, %v443
        %v445 = vmul.f32 %v435, %v440
        %v446 = vmul.f32 %v435, %v444
        %v447 = vadd.f32 %v431, %v445
        %v448 = vadd.f32 %v432, %v446
        %v449 = vcombine.high %v261, %v261
        %v451 = vadd.f32 %v447, %v261
        %v452 = vadd.f32 %v448, %v449
        %v455 = vcombine.low %v451, %v452
        %457 = vst [vmem:[%s258] sm:$0xff] %v455
        %s458 = sand.u32 %s156, 1
        %s459 = scalar_lea.sflag [#allocation4], %s458
        %s460 = sand.u32 %s156, 1
        %s461 = smul.addr %s460, 8
        %s462 = scalar_lea.vmem [#allocation5], %s461
        // Predicated region
        $region45: #{tpu_custom_call.1} parent=39 // pred_check
          %p463 = pneg %p166
        $region46: #{tpu_custom_call.1} parent=39 // pred_check_branch
          %465 = sbr.rel (%p463) target = $region48
        $region47: #{tpu_custom_call.1} parent=39 // pred_region
          %s466 = smul.u32 2, %s27
          %s468 = ssub.s32 128, 128
          %469 = vsyncadd %s459, %s468
          %s470 = smul.addr %s26, 2
          %s471 = sadd.s32 %s466, %s470
          %s472 = smul.addr %s471, 64
          %s473 = scalar_lea.hbm %s5, %s472
          %s475 = sshll.u32 %s462, 4
          %s476 = int_to_ptr.vmem [resolvable:$true] %s475
          %478 = dma.vmem_to_hbm [thread:$0]  %s476, 128, %s473, %s459
        $region48: #{tpu_custom_call.1} parent=39 // pred_fallthru
          _
      $region40: #{tpu_custom_call.1} parent=5 // pred_fallthru
        _
      %p479 = scmp.le.s32.totalorder 2, %s17
      // Predicated region
      $region49: #{tpu_custom_call.1} parent=5 // pred_check
        %p480 = pneg %p479
      $region50: #{tpu_custom_call.1} parent=5 // pred_check_branch
        %482 = sbr.rel (%p480) target = $region52
      $region51: #{tpu_custom_call.1} parent=5 // pred_region
        %s483 = ssub.s32 %s17, 2
        // Predicated region
        $region53: #{tpu_custom_call.1} parent=51 // pred_check
          %p484 = pneg %p172
        $region54: #{tpu_custom_call.1} parent=51 // pred_check_branch
          %486 = sbr.rel (%p484) target = $region56
        $region55: #{tpu_custom_call.1} parent=51 // pred_region
          %s487 = sand.u32 %s157, 1
          %s488 = scalar_lea.sflag [#allocation4], %s487
          %s489 = sand.u32 %s157, 1
          %s490 = smul.addr %s489, 8
          %s491 = scalar_lea.vmem [#allocation5], %s490
          %492 = dma.done %s488, 128
        $region56: #{tpu_custom_call.1} parent=51 // pred_fallthru
          _
      $region52: #{tpu_custom_call.1} parent=5 // pred_fallthru
        _
    $region6: #{tpu_custom_call.1} parent=1 // loop_footer
      %s21 = sadd.s32 1, %s17
    $region7: #{tpu_custom_call.1} parent=1 // loop_footer_branch
      %16 = sbr.rel target = $region3
    $region8: #{tpu_custom_call.1} parent=1 // loop_exit
      _
    %493 = vsyncpa [#allocation3], 1
    %s494 = scalar_lea.sflag [#allocation3], 1
    %495 = vsyncpa %s494, 1
    %496 = vsyncpa [#allocation4], 1
    %s497 = scalar_lea.sflag [#allocation4], 1
    %498 = vsyncpa %s497, 1

</llo_original>
